<compile_context>
chip_gen: v7x
topology: tpu7x:2x2x1
jax: 0.10.0
libtpu: 0.0.40
codegen_flags: <defaults>
</compile_context>

<pallas_src>
import functools
import numpy as np

import jax
import jax.numpy as jnp
from jax import lax
from jax.experimental import pallas as pl
from jax.experimental.pallas import tpu as pltpu


def _static_roll(x, shift, axis):
    """Circular roll by a static (trace-time) amount; matches torch.roll/jnp.roll.

    out[i] = x[(i - shift) % n]  ==  concat(x[n-s:], x[:n-s]) with s = shift % n.
    """
    n = x.shape[axis]
    s = shift % n
    if s == 0:
        return x
    lo = lax.slice_in_dim(x, n - s, n, axis=axis)
    hi = lax.slice_in_dim(x, 0, n - s, axis=axis)
    return lax.concatenate([lo, hi], dimension=axis)


def cyclic_shift_kernel(x_ref, o_ref, *, shift_h, shift_wc):
    # x_ref / o_ref: (H, W*C) — one full image slab for the current batch
    # element, channels folded into the lane dimension.
    x = x_ref[...]
    x = _static_roll(x, shift_h, axis=0)    # roll over H
    x = _static_roll(x, shift_wc, axis=1)   # roll over W (folded as W*C lanes)
    o_ref[...] = x


def cyclic_shift(x, displacement):
    """Equivalent of torch.roll(x, shifts=(d, d), dims=(1, 2)) for x: (B, H, W, C)."""
    B, H, W, C = x.shape
    shift_h = displacement % H           # Python modulo handles negative d
    shift_wc = (displacement % W) * C    # W-roll by d == lane-roll by d*C on (H, W*C)

    # Contiguous merge of the two trailing dims: no data movement, and every
    # vector load/store in the kernel becomes lane-dense (trailing dim W*C).
    xf = x.reshape(B, H, W * C)

    kernel = functools.partial(cyclic_shift_kernel,
                               shift_h=shift_h, shift_wc=shift_wc)
    out = pl.pallas_call(
        kernel,
        out_shape=jax.ShapeDtypeStruct((B, H, W * C), x.dtype),
        grid=(B,),
        in_specs=[pl.BlockSpec((None, H, W * C), lambda b: (b, 0, 0))],
        out_specs=pl.BlockSpec((None, H, W * C), lambda b: (b, 0, 0)),
        compiler_params=pltpu.CompilerParams(
            dimension_semantics=("parallel",)),
    )(xf)
    return out.reshape(B, H, W, C)


if __name__ == "__main__":
    # Small shapes consistent with the module: channels-last feature map.
    B, H, W, C = 2, 16, 16, 32
    displacement = -3   # Swin uses CyclicShift(-d) before / CyclicShift(+d) after WSA

    key = jax.random.PRNGKey(0)
    x = jax.random.normal(key, (B, H, W, C), dtype=jnp.float32)

    out = cyclic_shift(x, displacement)
    out = jax.block_until_ready(out)

    # Exact-match check against the roll semantics of torch.roll / jnp.roll.
    ref = jnp.roll(x, shift=(displacement, displacement), axis=(1, 2))
    np.testing.assert_array_equal(np.asarray(out), np.asarray(ref))

    # The module is instantiated with both signs in Swin; check positive too.
    out_pos = jax.block_until_ready(cyclic_shift(x, 3))
    ref_pos = jnp.roll(x, shift=(3, 3), axis=(1, 2))
    np.testing.assert_array_equal(np.asarray(out_pos), np.asarray(ref_pos))

    print("KERNEL_OK")
</pallas_src>

<mosaic_0001>
module attributes {stable_mosaic.version = 11 : i64} {
  func.func @cyclic_shift_kernel(%arg0: i32, %arg1: memref<1x16x512xf32, #tpu.memory_space<vmem>>, %arg2: memref<1x16x512xf32, #tpu.memory_space<vmem>>) attributes {dimension_semantics = [#tpu.dimension_semantics<parallel>], iteration_bounds = array<i64: 2>, scalar_prefetch = 0 : i64, scratch_operands = 0 : i64, tpu.core_type = #tpu.core_type<tc>, window_params = [{transform_indices = @transform_0, window_bounds = array<i64: 1, 16, 512>}, {transform_indices = @transform_1, window_bounds = array<i64: 1, 16, 512>}]} {
    %c0 = arith.constant 0 : index
    %c0_0 = arith.constant 0 : index
    %c0_1 = arith.constant 0 : index
    %0 = vector.load %arg1[%c0, %c0_0, %c0_1] : memref<1x16x512xf32, #tpu.memory_space<vmem>>, vector<1x16x512xf32>
    %1 = vector.shape_cast %0 : vector<1x16x512xf32> to vector<16x512xf32>
    %2 = vector.extract_strided_slice %1 {offsets = [3, 0], sizes = [13, 512], strides = [1, 1]} : vector<16x512xf32> to vector<13x512xf32>
    %3 = vector.extract_strided_slice %1 {offsets = [0, 0], sizes = [3, 512], strides = [1, 1]} : vector<16x512xf32> to vector<3x512xf32>
    %4 = tpu.concatenate %2, %3 in 0 : vector<13x512xf32>, vector<3x512xf32> -> vector<16x512xf32>
    %5 = vector.extract_strided_slice %4 {offsets = [0, 96], sizes = [16, 416], strides = [1, 1]} : vector<16x512xf32> to vector<16x416xf32>
    %6 = vector.extract_strided_slice %4 {offsets = [0, 0], sizes = [16, 96], strides = [1, 1]} : vector<16x512xf32> to vector<16x96xf32>
    %7 = tpu.concatenate %5, %6 in 1 : vector<16x416xf32>, vector<16x96xf32> -> vector<16x512xf32>
    %c0_2 = arith.constant 0 : index
    %c0_3 = arith.constant 0 : index
    %c0_4 = arith.constant 0 : index
    %8 = vector.load %arg2[%c0_2, %c0_3, %c0_4] : memref<1x16x512xf32, #tpu.memory_space<vmem>>, vector<1x16x512xf32>
    %9 = vector.shape_cast %8 : vector<1x16x512xf32> to vector<16x512xf32>
    %10 = vector.shape_cast %7 : vector<16x512xf32> to vector<1x16x512xf32>
    tpu.vector_store %arg2[%c0_2, %c0_3, %c0_4], %10 {strides = array<i32>} : memref<1x16x512xf32, #tpu.memory_space<vmem>>, vector<1x16x512xf32>,
    return
  }
  func.func @transform_0(%arg0: i32) -> (i32, i32, i32) {
    %c0_i32 = arith.constant 0 : i32
    %c0_i32_0 = arith.constant 0 : i32
    %c0_i32_1 = arith.constant 0 : i32
    return %arg0, %c0_i32, %c0_i32_0 : i32, i32, i32
  }
  func.func @transform_1(%arg0: i32) -> (i32, i32, i32) {
    %c0_i32 = arith.constant 0 : i32
    %c0_i32_0 = arith.constant 0 : i32
    %c0_i32_1 = arith.constant 0 : i32
    return %arg0, %c0_i32, %c0_i32_0 : i32, i32, i32
  }
}

</mosaic_0001>

<llo_original>
// kernel: tpu_custom_call.1
$region0: #{tpu_custom_call.1}
  #allocation0 [shape = 'u32[]', space=smem, size = 0x4, offset = 0x4, fixed_abs, tag = 'smem constant byte address 0x4 - core index']
  #allocation1 [shape = 'u32[144,128]{1,0:T(1,128)}', space=vmem, size = 0x12000, scoped, tag = 'internal scratch']
  %s0 = inlined_call_operand.hbm [shape: f32[2,16,512], index: 0, kind: input, shape index: {}]
  %s1 = inlined_call_operand.hbm [shape: f32[2,16,512], index: 1, kind: output, shape index: {}]
  %s2 = sld [smem:[#allocation0]]
  $region41: #{tpu_custom_call.1} parent=0
    _
  %s4 = ssub.s32 1, %s2
  %s5 = scalar_select 0, %s4, %s2
  $region1: #{tpu_custom_call.1} parent=0
    #allocation2 [shape = 'u8[65536]{0}', space=vmem, size = 0x10000, scoped, tag = 'input window, operand 0']
    #allocation3 [shape = 's32[2]{0}', space=sflag, size = 0x8, scoped, tag = 'scoped memory for tpu_custom_call.1']
    #allocation4 [shape = 's32[2]{0}', space=sflag, size = 0x8, scoped, tag = 'scoped memory for tpu_custom_call.1']
    #allocation5 [shape = 'u8[65536]{0}', space=vmem, size = 0x10000, scoped, tag = 'output window, operand 0']
    %6 = vsyncpa [#allocation3], 0
    %s7 = scalar_lea.sflag [#allocation3], 1
    %8 = vsyncpa %s7, 0
    %9 = vsyncpa [#allocation4], 0
    %s10 = scalar_lea.sflag [#allocation4], 1
    %11 = vsyncpa %s10, 0
    loop: start=0, step=1, limit=4
    $region2: #{tpu_custom_call.1} parent=1 // loop_pre_header
      _
    $region3: #{tpu_custom_call.1} parent=1 // loop_header
      %s13 = sphi 0, %s17
      %p14 = scmp.ge.s32.totalorder %s13, 4
      %s23 = sphi 0, %s25
      %s26 = sphi 0, %s23
      %s27 = sphi 0, %s26
      %s43 = sphi 0, %s27
      %s49 = sphi 0, %s51
      %s52 = sphi 0, %s49
      %s53 = sphi 0, %s52
      %s69 = sphi 0, %s53
    $region4: #{tpu_custom_call.1} parent=1 // loop_header_branch
      %16 = sbr.rel (%p14) target = $region8
    $region5: #{tpu_custom_call.1} parent=1 // loop_body
      %s18 = ssub.s32 %s13, 1
      %s19 = ssub.s32 %s13, 2
      %s20 = sadd.s32 %s13, 1
      %s21 = ssub.s32 %s13, %s20
      %p22 = scmp.eq.s32.totalorder %s21, 0
      %s24 = sadd.s32 %s23, 1
      %s25 = scalar_select %p22, %s23, %s24
      %p28 = pneg %p22
      %p29 = scmp.eq.s32.totalorder %s13, 1
      %p30 = por %p28, %p29
      %p31 = scmp.ne.s32.totalorder %s23, %s26
      %p32 = scmp.eq.s32.totalorder %s13, 0
      %p33 = por %p31, %p32
      %p34 = scmp.ne.s32.totalorder %s23, %s26
      %p35 = scmp.eq.s32.totalorder %s18, 1
      %p36 = por %p34, %p35
      %p37 = scmp.ne.s32.totalorder %s26, %s27
      %p38 = scmp.eq.s32.totalorder %s18, 0
      %p39 = por %p37, %p38
      %p40 = scmp.ne.s32.totalorder %s26, %s27
      %p41 = scmp.eq.s32.totalorder %s19, 1
      %p42 = por %p40, %p41
      %p44 = scmp.ne.s32.totalorder %s27, %s43
      %p45 = scmp.eq.s32.totalorder %s19, 0
      %p46 = por %p44, %p45
      %s47 = ssub.s32 %s13, %s20
      %p48 = scmp.eq.s32.totalorder %s47, 0
      %s50 = sadd.s32 %s49, 1
      %s51 = scalar_select %p48, %s49, %s50
      %p54 = pneg %p48
      %p55 = scmp.eq.s32.totalorder %s13, 1
      %p56 = por %p54, %p55
      %p57 = scmp.ne.s32.totalorder %s49, %s52
      %p58 = scmp.eq.s32.totalorder %s13, 0
      %p59 = por %p57, %p58
      %p60 = scmp.ne.s32.totalorder %s49, %s52
      %p61 = scmp.eq.s32.totalorder %s18, 1
      %p62 = por %p60, %p61
      %p63 = scmp.ne.s32.totalorder %s52, %s53
      %p64 = scmp.eq.s32.totalorder %s18, 0
      %p65 = por %p63, %p64
      %p66 = scmp.ne.s32.totalorder %s52, %s53
      %p67 = scmp.eq.s32.totalorder %s19, 1
      %p68 = por %p66, %p67
      %p70 = scmp.ne.s32.totalorder %s53, %s69
      %p71 = scmp.eq.s32.totalorder %s19, 0
      %p72 = por %p70, %p71
      %p73 = scmp.le.s32.totalorder 1, %s13
      %p74 = scmp.lt.s32.totalorder %s13, 3
      %p75 = pnand %p73, %p74
      %p76 = pneg %p75
      // Predicated region
      $region9: #{tpu_custom_call.1} parent=5 // pred_check
        _
      $region10: #{tpu_custom_call.1} parent=5 // pred_check_branch
        %78 = sbr.rel (%p75) target = $region12
      $region11: #{tpu_custom_call.1} parent=5 // pred_region
        %s79 = ssub.s32 %s13, 1
      $region12: #{tpu_custom_call.1} parent=5 // pred_fallthru
        _
      %p80 = scmp.lt.s32.totalorder %s13, 2
      // Predicated region
      $region13: #{tpu_custom_call.1} parent=5 // pred_check
        %p81 = pneg %p80
      $region14: #{tpu_custom_call.1} parent=5 // pred_check_branch
        %83 = sbr.rel (%p81) target = $region16
      $region15: #{tpu_custom_call.1} parent=5 // pred_region
        // Predicated region
        $region17: #{tpu_custom_call.1} parent=15 // pred_check
          %p84 = pneg %p33
        $region18: #{tpu_custom_call.1} parent=15 // pred_check_branch
          %86 = sbr.rel (%p84) target = $region20
        $region19: #{tpu_custom_call.1} parent=15 // pred_region
          %s87 = sand.u32 %s23, 1
          %s88 = scalar_lea.sflag [#allocation3], %s87
          %s89 = sand.u32 %s23, 1
          %s90 = smul.addr %s89, 64
          %s91 = scalar_lea.vmem [#allocation2], %s90
          %s93 = ssub.s32 1024, 1024
          %94 = vsyncadd %s88, %s93
          %s95 = smul.addr %s13, 8
          %s96 = smul.addr %s95, 128
          %s97 = scalar_lea.hbm %s0, %s96
          %s98 = sshll.u32 %s91, 4
          %s99 = int_to_ptr.vmem [resolvable:$true] %s98
          %104 = dma.hbm_to_vmem [thread:$0]  %s97, 1024, %s99, %s88, 512, 512, 32
        $region20: #{tpu_custom_call.1} parent=15 // pred_fallthru
          _
      $region16: #{tpu_custom_call.1} parent=5 // pred_fallthru
        _
      %p105 = scmp.le.s32.totalorder 1, %s13
      %p106 = scmp.lt.s32.totalorder %s13, 3
      %p107 = pnand %p105, %p106
      %p108 = pneg %p107
      // Predicated region
      $region21: #{tpu_custom_call.1} parent=5 // pred_check
        _
      $region22: #{tpu_custom_call.1} parent=5 // pred_check_branch
        %110 = sbr.rel (%p107) target = $region24
      $region23: #{tpu_custom_call.1} parent=5 // pred_region
        %s111 = ssub.s32 %s13, 1
        %s112 = sand.u32 %s26, 1
        %s113 = scalar_lea.sflag [#allocation3], %s112
        %s114 = sand.u32 %s26, 1
        %s115 = smul.addr %s114, 64
        %s116 = scalar_lea.vmem [#allocation2], %s115
        // Predicated region
        $region25: #{tpu_custom_call.1} parent=23 // pred_check
          %p117 = pneg %p39
        $region26: #{tpu_custom_call.1} parent=23 // pred_check_branch
          %119 = sbr.rel (%p117) target = $region28
        $region27: #{tpu_custom_call.1} parent=23 // pred_region
          %120 = dma.done %s113, 1024
        $region28: #{tpu_custom_call.1} parent=23 // pred_fallthru
          _
        %s121 = sand.u32 %s26, 1
        %s122 = scalar_lea.sflag [#allocation3], %s121
        %s123 = sand.u32 %s26, 1
        %s124 = smul.addr %s123, 64
        %s125 = scalar_lea.vmem [#allocation2], %s124
        %p126 = pneg %p39
        %p127 = pneg %p36
        %p128 = pneg %p65
        %p129 = pneg %p62
        %s130 = sand.u32 %s52, 1
        %s131 = scalar_lea.sflag [#allocation4], %s130
        %s132 = sand.u32 %s52, 1
        %s133 = smul.addr %s132, 64
        %s134 = scalar_lea.vmem [#allocation5], %s133
        %v135 = vld [vmem:[%s116] sm:$0xff]
        %v136 = vld [vmem:[%s116 + $0x8] sm:$0xff]
        %v137 = vld [vmem:[%s116 + $0x10] sm:$0xff]
        %v138 = vld [vmem:[%s116 + $0x18] sm:$0xff]
        %v139 = vld [vmem:[%s116 + $0x20] sm:$0xff]
        %v140 = vld [vmem:[%s116 + $0x28] sm:$0xff]
        %v141 = vld [vmem:[%s116 + $0x30] sm:$0xff]
        %v142 = vld [vmem:[%s116 + $0x38] sm:$0xff]
        %vm151 = vcmask 1044480
        %v152 = vrot.slane %v135, 3
        %v153 = vrot.slane %v139, 3
        %v154 = vsel %vm151, %v152, %v153
        %v155 = vrot.slane %v136, 3
        %v156 = vrot.slane %v140, 3
        %v157 = vsel %vm151, %v155, %v156
        %v158 = vrot.slane %v137, 3
        %v159 = vrot.slane %v141, 3
        %v160 = vsel %vm151, %v158, %v159
        %v161 = vrot.slane %v138, 3
        %v162 = vrot.slane %v142, 3
        %v163 = vsel %vm151, %v161, %v162
        %v172 = vsel %vm151, %v153, %v152
        %v173 = vsel %vm151, %v156, %v155
        %v174 = vsel %vm151, %v159, %v158
        %v175 = vsel %vm151, %v162, %v161
        %180 = vrot.lane.b32.xlu0 %v154, 32
        %v181 = vpop.permute.xlu0 %180
        %182 = vrot.lane.b32.xlu0 %v157, 32
        %v183 = vpop.permute.xlu0 %182
        %184 = vrot.lane.b32.xlu0 %v160, 32
        %v185 = vpop.permute.xlu0 %184
        %186 = vrot.lane.b32.xlu0 %v163, 32
        %v187 = vpop.permute.xlu0 %186
        %188 = vrot.lane.b32.xlu0 %v172, 32
        %v189 = vpop.permute.xlu0 %188
        %190 = vrot.lane.b32.xlu0 %v173, 32
        %v191 = vpop.permute.xlu0 %190
        %192 = vrot.lane.b32.xlu0 %v174, 32
        %v193 = vpop.permute.xlu0 %192
        %194 = vrot.lane.b32.xlu0 %v175, 32
        %v195 = vpop.permute.xlu0 %194
        %vm196 = vcmask 261120
        %v197 = vsel %vm196, %v181, %v183
        %v198 = vsel %vm196, %v183, %v185
        %v199 = vsel %vm196, %v185, %v187
        %v200 = vsel %vm196, %v189, %v191
        %v201 = vsel %vm196, %v191, %v193
        %v202 = vsel %vm196, %v193, %v195
        %v213 = vsel %vm196, %v187, %v181
        %v214 = vsel %vm196, %v195, %v189
        %215 = vst [vmem:[%s134] sm:$0xff] %v197
        %216 = vst [vmem:[%s134 + $0x8] sm:$0xff] %v198
        %217 = vst [vmem:[%s134 + $0x10] sm:$0xff] %v199
        %218 = vst [vmem:[%s134 + $0x18] sm:$0xff] %v213
        %219 = vst [vmem:[%s134 + $0x20] sm:$0xff] %v200
        %220 = vst [vmem:[%s134 + $0x28] sm:$0xff] %v201
        %221 = vst [vmem:[%s134 + $0x30] sm:$0xff] %v202
        %222 = vst [vmem:[%s134 + $0x38] sm:$0xff] %v214
        %s223 = sand.u32 %s52, 1
        %s224 = scalar_lea.sflag [#allocation4], %s223
        %s225 = sand.u32 %s52, 1
        %s226 = smul.addr %s225, 64
        %s227 = scalar_lea.vmem [#allocation5], %s226
        // Predicated region
        $region29: #{tpu_custom_call.1} parent=23 // pred_check
          %p228 = pneg %p62
        $region30: #{tpu_custom_call.1} parent=23 // pred_check_branch
          %230 = sbr.rel (%p228) target = $region32
        $region31: #{tpu_custom_call.1} parent=23 // pred_region
          %s232 = ssub.s32 1024, 1024
          %233 = vsyncadd %s224, %s232
          %s234 = smul.addr %s18, 8
          %s235 = smul.addr %s234, 128
          %s236 = scalar_lea.hbm %s1, %s235
          %s237 = sshll.u32 %s227, 4
          %s238 = int_to_ptr.vmem [resolvable:$true] %s237
          %243 = dma.vmem_to_hbm [thread:$0]  %s238, 1024, %s236, %s224, 512, 512, 32
        $region32: #{tpu_custom_call.1} parent=23 // pred_fallthru
          _
      $region24: #{tpu_custom_call.1} parent=5 // pred_fallthru
        _
      %p244 = scmp.le.s32.totalorder 2, %s13
      // Predicated region
      $region33: #{tpu_custom_call.1} parent=5 // pred_check
        %p245 = pneg %p244
      $region34: #{tpu_custom_call.1} parent=5 // pred_check_branch
        %247 = sbr.rel (%p245) target = $region36
      $region35: #{tpu_custom_call.1} parent=5 // pred_region
        %s248 = ssub.s32 %s13, 2
        // Predicated region
        $region37: #{tpu_custom_call.1} parent=35 // pred_check
          %p249 = pneg %p68
        $region38: #{tpu_custom_call.1} parent=35 // pred_check_branch
          %251 = sbr.rel (%p249) target = $region40
        $region39: #{tpu_custom_call.1} parent=35 // pred_region
          %s252 = sand.u32 %s53, 1
          %s253 = scalar_lea.sflag [#allocation4], %s252
          %s254 = sand.u32 %s53, 1
          %s255 = smul.addr %s254, 64
          %s256 = scalar_lea.vmem [#allocation5], %s255
          %257 = dma.done %s253, 1024
        $region40: #{tpu_custom_call.1} parent=35 // pred_fallthru
          _
      $region36: #{tpu_custom_call.1} parent=5 // pred_fallthru
        _
    $region6: #{tpu_custom_call.1} parent=1 // loop_footer
      %s17 = sadd.s32 1, %s13
    $region7: #{tpu_custom_call.1} parent=1 // loop_footer_branch
      %12 = sbr.rel target = $region3
    $region8: #{tpu_custom_call.1} parent=1 // loop_exit
      _
    %258 = vsyncpa [#allocation3], 1
    %s259 = scalar_lea.sflag [#allocation3], 1
    %260 = vsyncpa %s259, 1
    %261 = vsyncpa [#allocation4], 1
    %s262 = scalar_lea.sflag [#allocation4], 1
    %263 = vsyncpa %s262, 1

</llo_original>
